<compile_context>
chip_gen: v6e
topology: v6e:2x2x1
jax: 0.10.0
libtpu: 0.0.40
codegen_flags: <defaults>
</compile_context>

<pallas_src>
import jax
import jax.numpy as jnp
from jax.experimental import pallas as pl
from jax.experimental.pallas import tpu as pltpu

NB_INPUT = 15
HID = 5
NB_LAYER = 2            # "nbLayer" constructor argument
NBLK = NB_LAYER + 2     # number of Linear+BN+ReLU blocks
WIDE = NB_INPUT * HID   # 75
FPAD = 128              # lane-padded feature width
EPS = 1e-5              # nn.BatchNorm1d default eps


def mynet_kernel(x_ref, w_ref, vec_ref, out_ref):
    """Whole forward pass on full-array VMEM tiles.

    x_ref:   (B, 128)            f32, features >= 15 are zero-padded
    w_ref:   (NBLK+1, 128, 128)  f32, zero-padded Linear weights (in, out);
                                 slot NBLK holds the final 15->1 weight in col 0
    vec_ref: (2*NBLK+1, 128)     f32: rows [0:NBLK) gamma, [NBLK:2*NBLK) beta,
                                 row 2*NBLK = final bias (col 0)
    out_ref: (B, 128)            f32, prediction in column 0
    """
    vecs = vec_ref[...]                 # load the tiny vector stack once
    h = x_ref[...]                      # (B, 128)

    for blk in range(NBLK):             # static unroll (NBLK is tiny)
        w = w_ref[blk]                  # (128, 128)
        # Linear (bias omitted: it cancels under batch-mean subtraction below)
        z = jnp.dot(h, w, preferred_element_type=jnp.float32)

        # One-pass training-mode BatchNorm1d statistics (biased variance)
        s1 = jnp.mean(z, axis=0, keepdims=True)          # (1, 128)
        s2 = jnp.mean(z * z, axis=0, keepdims=True)      # (1, 128)
        var = jnp.maximum(s2 - s1 * s1, 0.0)

        gamma = vecs[blk:blk + 1]                        # (1, 128)
        beta = vecs[NBLK + blk:NBLK + blk + 1]           # (1, 128)

        # Fold gamma into the normalization scale: (1,F) work instead of (B,F)
        scale = gamma * jax.lax.rsqrt(var + EPS)
        shift = beta - s1 * scale

        # BN + ReLU in one fused (B,F) pass
        h = jnp.maximum(z * scale + shift, 0.0)

    # Final Linear(15 -> 1), lane-padded so the store is lane-dense
    w_out = w_ref[NBLK]                                  # (128, 128), col 0 real
    b_out = vecs[2 * NBLK:2 * NBLK + 1]                  # (1, 128), col 0 real
    out_ref[...] = jnp.dot(h, w_out, preferred_element_type=jnp.float32) + b_out


def init_params(key, nb_input=NB_INPUT, nb_layer=NB_LAYER, hid=HID):
    """Deterministic synthetic parameters with the module's shapes (unpacked)."""
    wide = nb_input * hid
    dims = [(nb_input, wide)] + [(wide, wide)] * nb_layer + [(wide, nb_input)]

    params = []
    for (fan_in, fan_out) in dims:
        key, kw, kb, kg, kbeta = jax.random.split(key, 5)
        scale = 1.0 / jnp.sqrt(jnp.float32(fan_in))
        w = jax.random.uniform(kw, (fan_in, fan_out), jnp.float32, -scale, scale)
        b = jax.random.uniform(kb, (1, fan_out), jnp.float32, -scale, scale)
        gamma = jax.random.uniform(kg, (1, fan_out), jnp.float32, 0.5, 1.5)
        beta = jax.random.uniform(kbeta, (1, fan_out), jnp.float32, -0.3, 0.3)
        params += [w, b, gamma, beta]

    key, kw, kb = jax.random.split(key, 3)
    scale = 1.0 / jnp.sqrt(jnp.float32(nb_input))
    w_out = jax.random.uniform(kw, (nb_input, 1), jnp.float32, -scale, scale)
    b_out = jax.random.uniform(kb, (1, 1), jnp.float32, -scale, scale)
    params += [w_out, b_out]
    return params


def pack_params(params):
    """Pack the per-layer arrays into 2 lane-padded stacks (2 DMAs total)."""
    w_stack = jnp.zeros((NBLK + 1, FPAD, FPAD), jnp.float32)
    vec_stack = jnp.zeros((2 * NBLK + 1, FPAD), jnp.float32)

    for blk in range(NBLK):
        w, _b, g, beta = params[4 * blk:4 * blk + 4]
        fi, fo = w.shape
        w_stack = w_stack.at[blk, :fi, :fo].set(w)
        vec_stack = vec_stack.at[blk, :fo].set(g[0])
        vec_stack = vec_stack.at[NBLK + blk, :fo].set(beta[0])
        # The Linear bias inside a BN block cancels exactly under batch-mean
        # subtraction, so it is intentionally not packed / not applied.

    w_out, b_out = params[-2], params[-1]
    fi, fo = w_out.shape
    w_stack = w_stack.at[NBLK, :fi, :fo].set(w_out)
    vec_stack = vec_stack.at[2 * NBLK, :fo].set(b_out[0])
    return w_stack, vec_stack


@jax.jit
def mynet_forward(x, w_stack, vec_stack):
    batch = x.shape[0]
    # Pad features to the full 128-lane width (layout plumbing in the wrapper).
    x_pad = jnp.zeros((batch, FPAD), jnp.float32).at[:, :NB_INPUT].set(
        x.astype(jnp.float32))

    vmem = pl.BlockSpec(memory_space=pltpu.MemorySpace.VMEM)
    out = pl.pallas_call(
        mynet_kernel,
        out_shape=jax.ShapeDtypeStruct((batch, FPAD), jnp.float32),
        in_specs=[vmem, vmem, vmem],
        out_specs=vmem,
    )(x_pad, w_stack, vec_stack)
    return out[:, :1]


def mynet_reference(x, params):
    """Pure-JAX reference on the unpacked params (full biases, two-pass var)."""
    h = x.astype(jnp.float32)
    for blk in range(NBLK):
        w, b, g, beta = params[4 * blk:4 * blk + 4]
        h = h @ w + b
        mean = jnp.mean(h, axis=0, keepdims=True)
        var = jnp.mean(jnp.square(h - mean), axis=0, keepdims=True)
        h = (h - mean) / jnp.sqrt(var + EPS)
        h = jnp.maximum(h * g + beta, 0.0)
    return h @ params[-2] + params[-1]


if __name__ == "__main__":
    key = jax.random.PRNGKey(0)
    key, kx, kp = jax.random.split(key, 3)

    batch = 8
    x = jax.random.normal(kx, (batch, NB_INPUT), jnp.float32)
    params = init_params(kp)
    w_stack, vec_stack = pack_params(params)

    out = mynet_forward(x, w_stack, vec_stack)
    out = jax.block_until_ready(out)

    ref = mynet_reference(x, params)
    assert out.shape == (batch, 1)
    assert jnp.allclose(out, ref, rtol=2e-2, atol=2e-3), (out, ref)

    print("KERNEL_OK")
</pallas_src>

<mosaic_0001>
module attributes {stable_mosaic.version = 11 : i64} {
  func.func @mynet_kernel(%arg0: memref<8x128xf32, #tpu.memory_space<vmem>>, %arg1: memref<5x128x128xf32, #tpu.memory_space<vmem>>, %arg2: memref<9x128xf32, #tpu.memory_space<vmem>>, %arg3: memref<8x128xf32, #tpu.memory_space<vmem>>) attributes {dimension_semantics = [], scalar_prefetch = 0 : i64, scratch_operands = 0 : i64, tpu.core_type = #tpu.core_type<tc>} {
    %c0 = arith.constant 0 : index
    %c0_0 = arith.constant 0 : index
    %0 = vector.load %arg2[%c0, %c0_0] : memref<9x128xf32, #tpu.memory_space<vmem>>, vector<9x128xf32>
    %c0_1 = arith.constant 0 : index
    %c0_2 = arith.constant 0 : index
    %1 = vector.load %arg0[%c0_1, %c0_2] : memref<8x128xf32, #tpu.memory_space<vmem>>, vector<8x128xf32>
    %c0_3 = arith.constant 0 : index
    %c0_4 = arith.constant 0 : index
    %c0_5 = arith.constant 0 : index
    %2 = vector.load %arg1[%c0_3, %c0_4, %c0_5] : memref<5x128x128xf32, #tpu.memory_space<vmem>>, vector<1x128x128xf32>
    %3 = vector.shape_cast %2 : vector<1x128x128xf32> to vector<128x128xf32>
    %cst = arith.constant dense<0.000000e+00> : vector<8x128xf32>
    %4 = tpu.matmul %1, %3, %cst {dimension_numbers = #tpu.dot_dimension_numbers<[1], [0], [0], [1], [0, 0, 1, 1], [], []>} : vector<8x128xf32>, vector<128x128xf32>, vector<8x128xf32> -> vector<8x128xf32>
    %cst_6 = arith.constant dense<0.000000e+00> : vector<128xf32>
    %5 = vector.multi_reduction <add>, %4, %cst_6 [0] : vector<8x128xf32> to vector<128xf32>
    %6 = vector.shape_cast %5 : vector<128xf32> to vector<1x128xf32>
    %cst_7 = arith.constant 8.000000e+00 : f32
    %7 = vector.broadcast %cst_7 : f32 to vector<1x128xf32>
    %8 = arith.divf %6, %7 : vector<1x128xf32>
    %9 = arith.mulf %4, %4 : vector<8x128xf32>
    %cst_8 = arith.constant dense<0.000000e+00> : vector<128xf32>
    %10 = vector.multi_reduction <add>, %9, %cst_8 [0] : vector<8x128xf32> to vector<128xf32>
    %11 = vector.shape_cast %10 : vector<128xf32> to vector<1x128xf32>
    %cst_9 = arith.constant 8.000000e+00 : f32
    %12 = vector.broadcast %cst_9 : f32 to vector<1x128xf32>
    %13 = arith.divf %11, %12 : vector<1x128xf32>
    %14 = arith.mulf %8, %8 : vector<1x128xf32>
    %15 = arith.subf %13, %14 : vector<1x128xf32>
    %cst_10 = arith.constant 0.000000e+00 : f32
    %16 = vector.broadcast %cst_10 : f32 to vector<1x128xf32>
    %17 = arith.maximumf %15, %16 : vector<1x128xf32>
    %18 = vector.extract_strided_slice %0 {offsets = [0, 0], sizes = [1, 128], strides = [1, 1]} : vector<9x128xf32> to vector<1x128xf32>
    %19 = vector.extract_strided_slice %0 {offsets = [4, 0], sizes = [1, 128], strides = [1, 1]} : vector<9x128xf32> to vector<1x128xf32>
    %cst_11 = arith.constant 9.99999974E-6 : f32
    %20 = vector.broadcast %cst_11 : f32 to vector<1x128xf32>
    %21 = arith.addf %17, %20 : vector<1x128xf32>
    %22 = math.rsqrt %21 : vector<1x128xf32>
    %23 = arith.mulf %18, %22 : vector<1x128xf32>
    %24 = arith.mulf %8, %23 : vector<1x128xf32>
    %25 = arith.subf %19, %24 : vector<1x128xf32>
    %26 = vector.broadcast %23 : vector<1x128xf32> to vector<8x128xf32>
    %27 = arith.mulf %4, %26 : vector<8x128xf32>
    %28 = vector.broadcast %25 : vector<1x128xf32> to vector<8x128xf32>
    %29 = arith.addf %27, %28 : vector<8x128xf32>
    %cst_12 = arith.constant 0.000000e+00 : f32
    %30 = vector.broadcast %cst_12 : f32 to vector<8x128xf32>
    %31 = arith.maximumf %29, %30 : vector<8x128xf32>
    %c1 = arith.constant 1 : index
    %c0_13 = arith.constant 0 : index
    %c0_14 = arith.constant 0 : index
    %32 = vector.load %arg1[%c1, %c0_13, %c0_14] : memref<5x128x128xf32, #tpu.memory_space<vmem>>, vector<1x128x128xf32>
    %33 = vector.shape_cast %32 : vector<1x128x128xf32> to vector<128x128xf32>
    %cst_15 = arith.constant dense<0.000000e+00> : vector<8x128xf32>
    %34 = tpu.matmul %31, %33, %cst_15 {dimension_numbers = #tpu.dot_dimension_numbers<[1], [0], [0], [1], [0, 0, 1, 1], [], []>} : vector<8x128xf32>, vector<128x128xf32>, vector<8x128xf32> -> vector<8x128xf32>
    %cst_16 = arith.constant dense<0.000000e+00> : vector<128xf32>
    %35 = vector.multi_reduction <add>, %34, %cst_16 [0] : vector<8x128xf32> to vector<128xf32>
    %36 = vector.shape_cast %35 : vector<128xf32> to vector<1x128xf32>
    %cst_17 = arith.constant 8.000000e+00 : f32
    %37 = vector.broadcast %cst_17 : f32 to vector<1x128xf32>
    %38 = arith.divf %36, %37 : vector<1x128xf32>
    %39 = arith.mulf %34, %34 : vector<8x128xf32>
    %cst_18 = arith.constant dense<0.000000e+00> : vector<128xf32>
    %40 = vector.multi_reduction <add>, %39, %cst_18 [0] : vector<8x128xf32> to vector<128xf32>
    %41 = vector.shape_cast %40 : vector<128xf32> to vector<1x128xf32>
    %cst_19 = arith.constant 8.000000e+00 : f32
    %42 = vector.broadcast %cst_19 : f32 to vector<1x128xf32>
    %43 = arith.divf %41, %42 : vector<1x128xf32>
    %44 = arith.mulf %38, %38 : vector<1x128xf32>
    %45 = arith.subf %43, %44 : vector<1x128xf32>
    %cst_20 = arith.constant 0.000000e+00 : f32
    %46 = vector.broadcast %cst_20 : f32 to vector<1x128xf32>
    %47 = arith.maximumf %45, %46 : vector<1x128xf32>
    %48 = vector.extract_strided_slice %0 {offsets = [1, 0], sizes = [1, 128], strides = [1, 1]} : vector<9x128xf32> to vector<1x128xf32>
    %49 = vector.extract_strided_slice %0 {offsets = [5, 0], sizes = [1, 128], strides = [1, 1]} : vector<9x128xf32> to vector<1x128xf32>
    %cst_21 = arith.constant 9.99999974E-6 : f32
    %50 = vector.broadcast %cst_21 : f32 to vector<1x128xf32>
    %51 = arith.addf %47, %50 : vector<1x128xf32>
    %52 = math.rsqrt %51 : vector<1x128xf32>
    %53 = arith.mulf %48, %52 : vector<1x128xf32>
    %54 = arith.mulf %38, %53 : vector<1x128xf32>
    %55 = arith.subf %49, %54 : vector<1x128xf32>
    %56 = vector.broadcast %53 : vector<1x128xf32> to vector<8x128xf32>
    %57 = arith.mulf %34, %56 : vector<8x128xf32>
    %58 = vector.broadcast %55 : vector<1x128xf32> to vector<8x128xf32>
    %59 = arith.addf %57, %58 : vector<8x128xf32>
    %cst_22 = arith.constant 0.000000e+00 : f32
    %60 = vector.broadcast %cst_22 : f32 to vector<8x128xf32>
    %61 = arith.maximumf %59, %60 : vector<8x128xf32>
    %c2 = arith.constant 2 : index
    %c0_23 = arith.constant 0 : index
    %c0_24 = arith.constant 0 : index
    %62 = vector.load %arg1[%c2, %c0_23, %c0_24] : memref<5x128x128xf32, #tpu.memory_space<vmem>>, vector<1x128x128xf32>
    %63 = vector.shape_cast %62 : vector<1x128x128xf32> to vector<128x128xf32>
    %cst_25 = arith.constant dense<0.000000e+00> : vector<8x128xf32>
    %64 = tpu.matmul %61, %63, %cst_25 {dimension_numbers = #tpu.dot_dimension_numbers<[1], [0], [0], [1], [0, 0, 1, 1], [], []>} : vector<8x128xf32>, vector<128x128xf32>, vector<8x128xf32> -> vector<8x128xf32>
    %cst_26 = arith.constant dense<0.000000e+00> : vector<128xf32>
    %65 = vector.multi_reduction <add>, %64, %cst_26 [0] : vector<8x128xf32> to vector<128xf32>
    %66 = vector.shape_cast %65 : vector<128xf32> to vector<1x128xf32>
    %cst_27 = arith.constant 8.000000e+00 : f32
    %67 = vector.broadcast %cst_27 : f32 to vector<1x128xf32>
    %68 = arith.divf %66, %67 : vector<1x128xf32>
    %69 = arith.mulf %64, %64 : vector<8x128xf32>
    %cst_28 = arith.constant dense<0.000000e+00> : vector<128xf32>
    %70 = vector.multi_reduction <add>, %69, %cst_28 [0] : vector<8x128xf32> to vector<128xf32>
    %71 = vector.shape_cast %70 : vector<128xf32> to vector<1x128xf32>
    %cst_29 = arith.constant 8.000000e+00 : f32
    %72 = vector.broadcast %cst_29 : f32 to vector<1x128xf32>
    %73 = arith.divf %71, %72 : vector<1x128xf32>
    %74 = arith.mulf %68, %68 : vector<1x128xf32>
    %75 = arith.subf %73, %74 : vector<1x128xf32>
    %cst_30 = arith.constant 0.000000e+00 : f32
    %76 = vector.broadcast %cst_30 : f32 to vector<1x128xf32>
    %77 = arith.maximumf %75, %76 : vector<1x128xf32>
    %78 = vector.extract_strided_slice %0 {offsets = [2, 0], sizes = [1, 128], strides = [1, 1]} : vector<9x128xf32> to vector<1x128xf32>
    %79 = vector.extract_strided_slice %0 {offsets = [6, 0], sizes = [1, 128], strides = [1, 1]} : vector<9x128xf32> to vector<1x128xf32>
    %cst_31 = arith.constant 9.99999974E-6 : f32
    %80 = vector.broadcast %cst_31 : f32 to vector<1x128xf32>
    %81 = arith.addf %77, %80 : vector<1x128xf32>
    %82 = math.rsqrt %81 : vector<1x128xf32>
    %83 = arith.mulf %78, %82 : vector<1x128xf32>
    %84 = arith.mulf %68, %83 : vector<1x128xf32>
    %85 = arith.subf %79, %84 : vector<1x128xf32>
    %86 = vector.broadcast %83 : vector<1x128xf32> to vector<8x128xf32>
    %87 = arith.mulf %64, %86 : vector<8x128xf32>
    %88 = vector.broadcast %85 : vector<1x128xf32> to vector<8x128xf32>
    %89 = arith.addf %87, %88 : vector<8x128xf32>
    %cst_32 = arith.constant 0.000000e+00 : f32
    %90 = vector.broadcast %cst_32 : f32 to vector<8x128xf32>
    %91 = arith.maximumf %89, %90 : vector<8x128xf32>
    %c3 = arith.constant 3 : index
    %c0_33 = arith.constant 0 : index
    %c0_34 = arith.constant 0 : index
    %92 = vector.load %arg1[%c3, %c0_33, %c0_34] : memref<5x128x128xf32, #tpu.memory_space<vmem>>, vector<1x128x128xf32>
    %93 = vector.shape_cast %92 : vector<1x128x128xf32> to vector<128x128xf32>
    %cst_35 = arith.constant dense<0.000000e+00> : vector<8x128xf32>
    %94 = tpu.matmul %91, %93, %cst_35 {dimension_numbers = #tpu.dot_dimension_numbers<[1], [0], [0], [1], [0, 0, 1, 1], [], []>} : vector<8x128xf32>, vector<128x128xf32>, vector<8x128xf32> -> vector<8x128xf32>
    %cst_36 = arith.constant dense<0.000000e+00> : vector<128xf32>
    %95 = vector.multi_reduction <add>, %94, %cst_36 [0] : vector<8x128xf32> to vector<128xf32>
    %96 = vector.shape_cast %95 : vector<128xf32> to vector<1x128xf32>
    %cst_37 = arith.constant 8.000000e+00 : f32
    %97 = vector.broadcast %cst_37 : f32 to vector<1x128xf32>
    %98 = arith.divf %96, %97 : vector<1x128xf32>
    %99 = arith.mulf %94, %94 : vector<8x128xf32>
    %cst_38 = arith.constant dense<0.000000e+00> : vector<128xf32>
    %100 = vector.multi_reduction <add>, %99, %cst_38 [0] : vector<8x128xf32> to vector<128xf32>
    %101 = vector.shape_cast %100 : vector<128xf32> to vector<1x128xf32>
    %cst_39 = arith.constant 8.000000e+00 : f32
    %102 = vector.broadcast %cst_39 : f32 to vector<1x128xf32>
    %103 = arith.divf %101, %102 : vector<1x128xf32>
    %104 = arith.mulf %98, %98 : vector<1x128xf32>
    %105 = arith.subf %103, %104 : vector<1x128xf32>
    %cst_40 = arith.constant 0.000000e+00 : f32
    %106 = vector.broadcast %cst_40 : f32 to vector<1x128xf32>
    %107 = arith.maximumf %105, %106 : vector<1x128xf32>
    %108 = vector.extract_strided_slice %0 {offsets = [3, 0], sizes = [1, 128], strides = [1, 1]} : vector<9x128xf32> to vector<1x128xf32>
    %109 = vector.extract_strided_slice %0 {offsets = [7, 0], sizes = [1, 128], strides = [1, 1]} : vector<9x128xf32> to vector<1x128xf32>
    %cst_41 = arith.constant 9.99999974E-6 : f32
    %110 = vector.broadcast %cst_41 : f32 to vector<1x128xf32>
    %111 = arith.addf %107, %110 : vector<1x128xf32>
    %112 = math.rsqrt %111 : vector<1x128xf32>
    %113 = arith.mulf %108, %112 : vector<1x128xf32>
    %114 = arith.mulf %98, %113 : vector<1x128xf32>
    %115 = arith.subf %109, %114 : vector<1x128xf32>
    %116 = vector.broadcast %113 : vector<1x128xf32> to vector<8x128xf32>
    %117 = arith.mulf %94, %116 : vector<8x128xf32>
    %118 = vector.broadcast %115 : vector<1x128xf32> to vector<8x128xf32>
    %119 = arith.addf %117, %118 : vector<8x128xf32>
    %cst_42 = arith.constant 0.000000e+00 : f32
    %120 = vector.broadcast %cst_42 : f32 to vector<8x128xf32>
    %121 = arith.maximumf %119, %120 : vector<8x128xf32>
    %c4 = arith.constant 4 : index
    %c0_43 = arith.constant 0 : index
    %c0_44 = arith.constant 0 : index
    %122 = vector.load %arg1[%c4, %c0_43, %c0_44] : memref<5x128x128xf32, #tpu.memory_space<vmem>>, vector<1x128x128xf32>
    %123 = vector.shape_cast %122 : vector<1x128x128xf32> to vector<128x128xf32>
    %124 = vector.extract_strided_slice %0 {offsets = [8, 0], sizes = [1, 128], strides = [1, 1]} : vector<9x128xf32> to vector<1x128xf32>
    %cst_45 = arith.constant dense<0.000000e+00> : vector<8x128xf32>
    %125 = tpu.matmul %121, %123, %cst_45 {dimension_numbers = #tpu.dot_dimension_numbers<[1], [0], [0], [1], [0, 0, 1, 1], [], []>} : vector<8x128xf32>, vector<128x128xf32>, vector<8x128xf32> -> vector<8x128xf32>
    %126 = vector.broadcast %124 : vector<1x128xf32> to vector<8x128xf32>
    %127 = arith.addf %125, %126 : vector<8x128xf32>
    %c0_46 = arith.constant 0 : index
    %c0_47 = arith.constant 0 : index
    %128 = vector.load %arg3[%c0_46, %c0_47] : memref<8x128xf32, #tpu.memory_space<vmem>>, vector<8x128xf32>
    tpu.vector_store %arg3[%c0_46, %c0_47], %127 {strides = array<i32>} : memref<8x128xf32, #tpu.memory_space<vmem>>, vector<8x128xf32>,
    return
  }
}

</mosaic_0001>

<llo_original>
// kernel: mynet_forward.1
$region0: #{mynet_forward.1}
  #allocation0 [shape = 'u32[]', space=smem, size = 0x4, offset = 0x4, fixed_abs, tag = 'smem constant byte address 0x4 - core index']
  #allocation1 [shape = 'u32[144,128]{1,0:T(1,128)}', space=vmem, size = 0x12000, scoped, tag = 'internal scratch']
  %s0 = inlined_call_operand.vmem [shape: f32[8,128], index: 0, kind: input, shape index: {}]
  %s1 = inlined_call_operand.hbm [shape: f32[5,128,128], index: 1, kind: input, shape index: {}]
  %s2 = inlined_call_operand.vmem [shape: f32[9,128], index: 2, kind: input, shape index: {}]
  %s3 = inlined_call_operand.vmem [shape: f32[8,128], index: 3, kind: output, shape index: {}]
  %s4 = sld [smem:[#allocation0]]
  $region26: #{mynet_forward.1} parent=0
    _
  %s6 = ssub.s32 1, %s4
  %s7 = scalar_select 0, %s6, %s4
  $region1: #{mynet_forward.1} parent=0
    #allocation2 [shape = 'u8[327680]{0}', space=vmem, size = 0x50000, scoped, tag = 'input window, operand 1, single buffered']
    #allocation3 [shape = 's32[1]{0}', space=sflag, size = 0x4, scoped, tag = 'scoped memory for mynet_forward.1']
    %8 = vsyncpa [#allocation3], 0
    // Predicated region
    $region2: #{mynet_forward.1} parent=1 // pred_check
      _
    $region3: #{mynet_forward.1} parent=1 // pred_check_branch
      %10 = sbr.rel (0) target = $region5
    $region4: #{mynet_forward.1} parent=1 // pred_region
      _
    $region5: #{mynet_forward.1} parent=1 // pred_fallthru
      _
    // Predicated region
    $region6: #{mynet_forward.1} parent=1 // pred_check
      _
    $region7: #{mynet_forward.1} parent=1 // pred_check_branch
      %12 = sbr.rel (0) target = $region9
    $region8: #{mynet_forward.1} parent=1 // pred_region
      %s14 = ssub.s32 10240, 10240
      %15 = vsyncadd [#allocation3], %s14
      %s16 = sshll.u32 [#allocation2], 4
      %s17 = int_to_ptr.vmem [resolvable:$true] %s16
      %22 = dma.hbm_to_vmem [thread:$0]  %s1, 10240, %s17, [#allocation3], 128, 128, 8
    $region9: #{mynet_forward.1} parent=1 // pred_fallthru
      _
    // Predicated region
    $region10: #{mynet_forward.1} parent=1 // pred_check
      _
    $region11: #{mynet_forward.1} parent=1 // pred_check_branch
      %24 = sbr.rel (0) target = $region13
    $region12: #{mynet_forward.1} parent=1 // pred_region
      _
    $region13: #{mynet_forward.1} parent=1 // pred_fallthru
      _
    // Predicated region
    $region14: #{mynet_forward.1} parent=1 // pred_check
      _
    $region15: #{mynet_forward.1} parent=1 // pred_check_branch
      %26 = sbr.rel (0) target = $region17
    $region16: #{mynet_forward.1} parent=1 // pred_region
      %27 = dma.done [#allocation3], 10240
    $region17: #{mynet_forward.1} parent=1 // pred_fallthru
      _
    %v28 = vld [vmem:[%s2] sm:$0xff]
    %v29 = vld [vmem:[%s2 + $0x8] sm:$0x1]
    %v30 = vld [vmem:[%s0] sm:$0xff]
    %v31 = vld [vmem:[#allocation2] sm:$0xff]
    %v32 = vld [vmem:[#allocation2 + $0x8] sm:$0xff]
    %v33 = vld [vmem:[#allocation2 + $0x10] sm:$0xff]
    %v34 = vld [vmem:[#allocation2 + $0x18] sm:$0xff]
    %v35 = vld [vmem:[#allocation2 + $0x20] sm:$0xff]
    %v36 = vld [vmem:[#allocation2 + $0x28] sm:$0xff]
    %v37 = vld [vmem:[#allocation2 + $0x30] sm:$0xff]
    %v38 = vld [vmem:[#allocation2 + $0x38] sm:$0xff]
    %v39 = vld [vmem:[#allocation2 + $0x40] sm:$0xff]
    %v40 = vld [vmem:[#allocation2 + $0x48] sm:$0xff]
    %v41 = vld [vmem:[#allocation2 + $0x50] sm:$0xff]
    %v42 = vld [vmem:[#allocation2 + $0x58] sm:$0xff]
    %v43 = vld [vmem:[#allocation2 + $0x60] sm:$0xff]
    %v44 = vld [vmem:[#allocation2 + $0x68] sm:$0xff]
    %v45 = vld [vmem:[#allocation2 + $0x70] sm:$0xff]
    %v46 = vld [vmem:[#allocation2 + $0x78] sm:$0xff]
    %47 = vmatprep.subr.mxu0 0.0
    %48 = vmatpush1.msra.mxu0 %v46
    %49 = vmatprep.subr.mxu0 0.0
    %50 = vmatpush1.msra.mxu0 %v45
    %51 = vmatprep.subr.mxu0 0.0
    %52 = vmatpush1.msra.mxu0 %v44
    %53 = vmatprep.subr.mxu0 0.0
    %54 = vmatpush1.msra.mxu0 %v43
    %55 = vmatprep.subr.mxu0 0.0
    %56 = vmatpush1.msra.mxu0 %v42
    %57 = vmatprep.subr.mxu0 0.0
    %58 = vmatpush1.msra.mxu0 %v41
    %59 = vmatprep.subr.mxu0 0.0
    %60 = vmatpush1.msra.mxu0 %v40
    %61 = vmatprep.subr.mxu0 0.0
    %62 = vmatpush1.msra.mxu0 %v39
    %63 = vmatprep.subr.mxu0 0.0
    %64 = vmatpush1.msra.mxu0 %v38
    %65 = vmatprep.subr.mxu0 0.0
    %66 = vmatpush1.msra.mxu0 %v37
    %67 = vmatprep.subr.mxu0 0.0
    %68 = vmatpush1.msra.mxu0 %v36
    %69 = vmatprep.subr.mxu0 0.0
    %70 = vmatpush1.msra.mxu0 %v35
    %71 = vmatprep.subr.mxu0 0.0
    %72 = vmatpush1.msra.mxu0 %v34
    %73 = vmatprep.subr.mxu0 0.0
    %74 = vmatpush1.msra.mxu0 %v33
    %75 = vmatprep.subr.mxu0 0.0
    %76 = vmatpush1.msra.mxu0 %v32
    %77 = vmatprep.subr.mxu0 0.0
    %78 = vmatpush1.msra.mxu0 %v31
    %79 = vmatprep.subr.mxu0 0.0
    %80 = vmatpush2.msra.mxu0 0.0
    %81 = vmatprep.subr.mxu0 0.0
    %82 = vmatpush2.msra.mxu0 0.0
    %83 = vmatprep.subr.mxu0 0.0
    %84 = vmatpush2.msra.mxu0 0.0
    %85 = vmatprep.subr.mxu0 0.0
    %86 = vmatpush2.msra.mxu0 0.0
    %87 = vmatprep.subr.mxu0 0.0
    %88 = vmatpush2.msra.mxu0 0.0
    %89 = vmatprep.subr.mxu0 0.0
    %90 = vmatpush2.msra.mxu0 0.0
    %91 = vmatprep.subr.mxu0 0.0
    %92 = vmatpush2.msra.mxu0 0.0
    %93 = vmatprep.subr.mxu0 0.0
    %94 = vmatpush2.msra.mxu0 0.0
    %95 = vmatprep.subr.mxu0 0.0
    %96 = vmatpush2.msra.mxu0 0.0
    %97 = vmatprep.subr.mxu0 0.0
    %98 = vmatpush2.msra.mxu0 0.0
    %99 = vmatprep.subr.mxu0 0.0
    %100 = vmatpush2.msra.mxu0 0.0
    %101 = vmatprep.subr.mxu0 0.0
    %102 = vmatpush2.msra.mxu0 0.0
    %103 = vmatprep.subr.mxu0 0.0
    %104 = vmatpush2.msra.mxu0 0.0
    %105 = vmatprep.subr.mxu0 0.0
    %106 = vmatpush2.msra.mxu0 0.0
    %107 = vmatprep.subr.mxu0 0.0
    %108 = vmatpush2.msra.mxu0 0.0
    %109 = vmatprep.subr.mxu0 0.0
    %110 = vmatpush2.msra.mxu0 0.0
    %111 = vmatprep.mubr.f32.mxu0 0.0
    %112 = vmatmul.mubr.f32.gmra.mxu0 %v30
    %v113 = vpop.f32.mrf.mxu0
    %v114 = vadd.f32 0.0, %v113
    %v115 = vpop.f32.mrf.mxu0
    %116 = vdwg.mxu0
    %v117 = vrot.slane %v114, 4
    %v118 = vadd.f32 %v114, %v117
    %v119 = vrot.slane %v118, 2
    %v120 = vadd.f32 %v118, %v119
    %v121 = vrot.slane %v120, 1
    %v122 = vadd.f32 %v120, %v121
    %v123 = vrcp.pop 8.0
    %v124 = vmul.f32 %v122, %v123
    %v125 = vmul.f32 %v114, %v114
    %v126 = vrot.slane %v125, 4
    %v127 = vadd.f32 %v125, %v126
    %v128 = vrot.slane %v127, 2
    %v129 = vadd.f32 %v127, %v128
    %v130 = vrot.slane %v129, 1
    %v131 = vadd.f32 %v129, %v130
    %v132 = vmul.f32 %v131, %v123
    %v133 = vmul.f32 %v124, %v124
    %v134 = vsub.f32 %v132, %v133
    %v135 = vmax.f32 %v134, 0.0
    %v136 = vadd.f32 %v135, 1e-05
    %v137 = vrsqrt.pop %v136
    %v138 = vmul.f32 %v28, %v137
    %v139 = vmul.f32 %v124, %v138
    %v141 = vrot.slane %v139, 4
    %v143 = vsub.f32 %v28, %v141
    %v144 = vlaneseq
    %v145 = vshrl.u32 %v144, 7
    %v146 = vsub.s32 0, %v145
    %v147 = vrot.slane %v138, %v146
    %v148 = vmul.f32 %v114, %v147
    %v149 = vlaneseq
    %v150 = vshrl.u32 %v149, 7
    %v151 = vsub.s32 4, %v150
    %v152 = vrot.slane %v143, %v151
    %v153 = vadd.f32 %v148, %v152
    %v154 = vmax.f32 %v153, 0.0
    %s155 = scalar_lea.vmem [#allocation2], 128
    %v156 = vld [vmem:[%s155] sm:$0xff]
    %v157 = vld [vmem:[%s155 + $0x8] sm:$0xff]
    %v158 = vld [vmem:[%s155 + $0x10] sm:$0xff]
    %v159 = vld [vmem:[%s155 + $0x18] sm:$0xff]
    %v160 = vld [vmem:[%s155 + $0x20] sm:$0xff]
    %v161 = vld [vmem:[%s155 + $0x28] sm:$0xff]
    %v162 = vld [vmem:[%s155 + $0x30] sm:$0xff]
    %v163 = vld [vmem:[%s155 + $0x38] sm:$0xff]
    %v164 = vld [vmem:[%s155 + $0x40] sm:$0xff]
    %v165 = vld [vmem:[%s155 + $0x48] sm:$0xff]
    %v166 = vld [vmem:[%s155 + $0x50] sm:$0xff]
    %v167 = vld [vmem:[%s155 + $0x58] sm:$0xff]
    %v168 = vld [vmem:[%s155 + $0x60] sm:$0xff]
    %v169 = vld [vmem:[%s155 + $0x68] sm:$0xff]
    %v170 = vld [vmem:[%s155 + $0x70] sm:$0xff]
    %v171 = vld [vmem:[%s155 + $0x78] sm:$0xff]
    %172 = vmatprep.subr.mxu0 0.0
    %173 = vmatpush1.msra.mxu0 %v171
    %174 = vmatprep.subr.mxu0 0.0
    %175 = vmatpush1.msra.mxu0 %v170
    %176 = vmatprep.subr.mxu0 0.0
    %177 = vmatpush1.msra.mxu0 %v169
    %178 = vmatprep.subr.mxu0 0.0
    %179 = vmatpush1.msra.mxu0 %v168
    %180 = vmatprep.subr.mxu0 0.0
    %181 = vmatpush1.msra.mxu0 %v167
    %182 = vmatprep.subr.mxu0 0.0
    %183 = vmatpush1.msra.mxu0 %v166
    %184 = vmatprep.subr.mxu0 0.0
    %185 = vmatpush1.msra.mxu0 %v165
    %186 = vmatprep.subr.mxu0 0.0
    %187 = vmatpush1.msra.mxu0 %v164
    %188 = vmatprep.subr.mxu0 0.0
    %189 = vmatpush1.msra.mxu0 %v163
    %190 = vmatprep.subr.mxu0 0.0
    %191 = vmatpush1.msra.mxu0 %v162
    %192 = vmatprep.subr.mxu0 0.0
    %193 = vmatpush1.msra.mxu0 %v161
    %194 = vmatprep.subr.mxu0 0.0
    %195 = vmatpush1.msra.mxu0 %v160
    %196 = vmatprep.subr.mxu0 0.0
    %197 = vmatpush1.msra.mxu0 %v159
    %198 = vmatprep.subr.mxu0 0.0
    %199 = vmatpush1.msra.mxu0 %v158
    %200 = vmatprep.subr.mxu0 0.0
    %201 = vmatpush1.msra.mxu0 %v157
    %202 = vmatprep.subr.mxu0 0.0
    %203 = vmatpush1.msra.mxu0 %v156
    %204 = vmatprep.subr.mxu0 0.0
    %205 = vmatpush2.msra.mxu0 0.0
    %206 = vmatprep.subr.mxu0 0.0
    %207 = vmatpush2.msra.mxu0 0.0
    %208 = vmatprep.subr.mxu0 0.0
    %209 = vmatpush2.msra.mxu0 0.0
    %210 = vmatprep.subr.mxu0 0.0
    %211 = vmatpush2.msra.mxu0 0.0
    %212 = vmatprep.subr.mxu0 0.0
    %213 = vmatpush2.msra.mxu0 0.0
    %214 = vmatprep.subr.mxu0 0.0
    %215 = vmatpush2.msra.mxu0 0.0
    %216 = vmatprep.subr.mxu0 0.0
    %217 = vmatpush2.msra.mxu0 0.0
    %218 = vmatprep.subr.mxu0 0.0
    %219 = vmatpush2.msra.mxu0 0.0
    %220 = vmatprep.subr.mxu0 0.0
    %221 = vmatpush2.msra.mxu0 0.0
    %222 = vmatprep.subr.mxu0 0.0
    %223 = vmatpush2.msra.mxu0 0.0
    %224 = vmatprep.subr.mxu0 0.0
    %225 = vmatpush2.msra.mxu0 0.0
    %226 = vmatprep.subr.mxu0 0.0
    %227 = vmatpush2.msra.mxu0 0.0
    %228 = vmatprep.subr.mxu0 0.0
    %229 = vmatpush2.msra.mxu0 0.0
    %230 = vmatprep.subr.mxu0 0.0
    %231 = vmatpush2.msra.mxu0 0.0
    %232 = vmatprep.subr.mxu0 0.0
    %233 = vmatpush2.msra.mxu0 0.0
    %234 = vmatprep.subr.mxu0 0.0
    %235 = vmatpush2.msra.mxu0 0.0
    %236 = vmatprep.mubr.f32.mxu0 0.0
    %237 = vmatmul.mubr.f32.gmra.mxu0 %v154
    %v238 = vpop.f32.mrf.mxu0
    %v239 = vadd.f32 0.0, %v238
    %v240 = vpop.f32.mrf.mxu0
    %241 = vdwg.mxu0
    %v242 = vrot.slane %v239, 4
    %v243 = vadd.f32 %v239, %v242
    %v244 = vrot.slane %v243, 2
    %v245 = vadd.f32 %v243, %v244
    %v246 = vrot.slane %v245, 1
    %v247 = vadd.f32 %v245, %v246
    %v248 = vmul.f32 %v247, %v123
    %v249 = vmul.f32 %v239, %v239
    %v250 = vrot.slane %v249, 4
    %v251 = vadd.f32 %v249, %v250
    %v252 = vrot.slane %v251, 2
    %v253 = vadd.f32 %v251, %v252
    %v254 = vrot.slane %v253, 1
    %v255 = vadd.f32 %v253, %v254
    %v256 = vmul.f32 %v255, %v123
    %v257 = vmul.f32 %v248, %v248
    %v258 = vsub.f32 %v256, %v257
    %v259 = vmax.f32 %v258, 0.0
    %v260 = vadd.f32 %v259, 1e-05
    %v261 = vrsqrt.pop %v260
    %v262 = vmul.f32 %v28, %v261
    %v263 = vmul.f32 %v248, %v262
    %v265 = vrot.slane %v263, 4
    %v267 = vsub.f32 %v28, %v265
    %v268 = vlaneseq
    %v269 = vshrl.u32 %v268, 7
    %v270 = vsub.s32 1, %v269
    %v271 = vrot.slane %v262, %v270
    %v272 = vmul.f32 %v239, %v271
    %v273 = vlaneseq
    %v274 = vshrl.u32 %v273, 7
    %v275 = vsub.s32 5, %v274
    %v276 = vrot.slane %v267, %v275
    %v277 = vadd.f32 %v272, %v276
    %v278 = vmax.f32 %v277, 0.0
    %s279 = scalar_lea.vmem [#allocation2], 256
    %v280 = vld [vmem:[%s279] sm:$0xff]
    %v281 = vld [vmem:[%s279 + $0x8] sm:$0xff]
    %v282 = vld [vmem:[%s279 + $0x10] sm:$0xff]
    %v283 = vld [vmem:[%s279 + $0x18] sm:$0xff]
    %v284 = vld [vmem:[%s279 + $0x20] sm:$0xff]
    %v285 = vld [vmem:[%s279 + $0x28] sm:$0xff]
    %v286 = vld [vmem:[%s279 + $0x30] sm:$0xff]
    %v287 = vld [vmem:[%s279 + $0x38] sm:$0xff]
    %v288 = vld [vmem:[%s279 + $0x40] sm:$0xff]
    %v289 = vld [vmem:[%s279 + $0x48] sm:$0xff]
    %v290 = vld [vmem:[%s279 + $0x50] sm:$0xff]
    %v291 = vld [vmem:[%s279 + $0x58] sm:$0xff]
    %v292 = vld [vmem:[%s279 + $0x60] sm:$0xff]
    %v293 = vld [vmem:[%s279 + $0x68] sm:$0xff]
    %v294 = vld [vmem:[%s279 + $0x70] sm:$0xff]
    %v295 = vld [vmem:[%s279 + $0x78] sm:$0xff]
    %296 = vmatprep.subr.mxu0 0.0
    %297 = vmatpush1.msra.mxu0 %v295
    %298 = vmatprep.subr.mxu0 0.0
    %299 = vmatpush1.msra.mxu0 %v294
    %300 = vmatprep.subr.mxu0 0.0
    %301 = vmatpush1.msra.mxu0 %v293
    %302 = vmatprep.subr.mxu0 0.0
    %303 = vmatpush1.msra.mxu0 %v292
    %304 = vmatprep.subr.mxu0 0.0
    %305 = vmatpush1.msra.mxu0 %v291
    %306 = vmatprep.subr.mxu0 0.0
    %307 = vmatpush1.msra.mxu0 %v290
    %308 = vmatprep.subr.mxu0 0.0
    %309 = vmatpush1.msra.mxu0 %v289
    %310 = vmatprep.subr.mxu0 0.0
    %311 = vmatpush1.msra.mxu0 %v288
    %312 = vmatprep.subr.mxu0 0.0
    %313 = vmatpush1.msra.mxu0 %v287
    %314 = vmatprep.subr.mxu0 0.0
    %315 = vmatpush1.msra.mxu0 %v286
    %316 = vmatprep.subr.mxu0 0.0
    %317 = vmatpush1.msra.mxu0 %v285
    %318 = vmatprep.subr.mxu0 0.0
    %319 = vmatpush1.msra.mxu0 %v284
    %320 = vmatprep.subr.mxu0 0.0
    %321 = vmatpush1.msra.mxu0 %v283
    %322 = vmatprep.subr.mxu0 0.0
    %323 = vmatpush1.msra.mxu0 %v282
    %324 = vmatprep.subr.mxu0 0.0
    %325 = vmatpush1.msra.mxu0 %v281
    %326 = vmatprep.subr.mxu0 0.0
    %327 = vmatpush1.msra.mxu0 %v280
    %328 = vmatprep.subr.mxu0 0.0
    %329 = vmatpush2.msra.mxu0 0.0
    %330 = vmatprep.subr.mxu0 0.0
    %331 = vmatpush2.msra.mxu0 0.0
    %332 = vmatprep.subr.mxu0 0.0
    %333 = vmatpush2.msra.mxu0 0.0
    %334 = vmatprep.subr.mxu0 0.0
    %335 = vmatpush2.msra.mxu0 0.0
    %336 = vmatprep.subr.mxu0 0.0
    %337 = vmatpush2.msra.mxu0 0.0
    %338 = vmatprep.subr.mxu0 0.0
    %339 = vmatpush2.msra.mxu0 0.0
    %340 = vmatprep.subr.mxu0 0.0
    %341 = vmatpush2.msra.mxu0 0.0
    %342 = vmatprep.subr.mxu0 0.0
    %343 = vmatpush2.msra.mxu0 0.0
    %344 = vmatprep.subr.mxu0 0.0
    %345 = vmatpush2.msra.mxu0 0.0
    %346 = vmatprep.subr.mxu0 0.0
    %347 = vmatpush2.msra.mxu0 0.0
    %348 = vmatprep.subr.mxu0 0.0
    %349 = vmatpush2.msra.mxu0 0.0
    %350 = vmatprep.subr.mxu0 0.0
    %351 = vmatpush2.msra.mxu0 0.0
    %352 = vmatprep.subr.mxu0 0.0
    %353 = vmatpush2.msra.mxu0 0.0
    %354 = vmatprep.subr.mxu0 0.0
    %355 = vmatpush2.msra.mxu0 0.0
    %356 = vmatprep.subr.mxu0 0.0
    %357 = vmatpush2.msra.mxu0 0.0
    %358 = vmatprep.subr.mxu0 0.0
    %359 = vmatpush2.msra.mxu0 0.0
    %360 = vmatprep.mubr.f32.mxu0 0.0
    %361 = vmatmul.mubr.f32.gmra.mxu0 %v278
    %v362 = vpop.f32.mrf.mxu0
    %v363 = vadd.f32 0.0, %v362
    %v364 = vpop.f32.mrf.mxu0
    %365 = vdwg.mxu0
    %v366 = vrot.slane %v363, 4
    %v367 = vadd.f32 %v363, %v366
    %v368 = vrot.slane %v367, 2
    %v369 = vadd.f32 %v367, %v368
    %v370 = vrot.slane %v369, 1
    %v371 = vadd.f32 %v369, %v370
    %v372 = vmul.f32 %v371, %v123
    %v373 = vmul.f32 %v363, %v363
    %v374 = vrot.slane %v373, 4
    %v375 = vadd.f32 %v373, %v374
    %v376 = vrot.slane %v375, 2
    %v377 = vadd.f32 %v375, %v376
    %v378 = vrot.slane %v377, 1
    %v379 = vadd.f32 %v377, %v378
    %v380 = vmul.f32 %v379, %v123
    %v381 = vmul.f32 %v372, %v372
    %v382 = vsub.f32 %v380, %v381
    %v383 = vmax.f32 %v382, 0.0
    %v384 = vadd.f32 %v383, 1e-05
    %v385 = vrsqrt.pop %v384
    %v386 = vmul.f32 %v28, %v385
    %v387 = vmul.f32 %v372, %v386
    %v389 = vrot.slane %v387, 4
    %v391 = vsub.f32 %v28, %v389
    %v392 = vlaneseq
    %v393 = vshrl.u32 %v392, 7
    %v394 = vsub.s32 2, %v393
    %v395 = vrot.slane %v386, %v394
    %v396 = vmul.f32 %v363, %v395
    %v397 = vlaneseq
    %v398 = vshrl.u32 %v397, 7
    %v399 = vsub.s32 6, %v398
    %v400 = vrot.slane %v391, %v399
    %v401 = vadd.f32 %v396, %v400
    %v402 = vmax.f32 %v401, 0.0
    %s403 = scalar_lea.vmem [#allocation2], 384
    %v404 = vld [vmem:[%s403] sm:$0xff]
    %v405 = vld [vmem:[%s403 + $0x8] sm:$0xff]
    %v406 = vld [vmem:[%s403 + $0x10] sm:$0xff]
    %v407 = vld [vmem:[%s403 + $0x18] sm:$0xff]
    %v408 = vld [vmem:[%s403 + $0x20] sm:$0xff]
    %v409 = vld [vmem:[%s403 + $0x28] sm:$0xff]
    %v410 = vld [vmem:[%s403 + $0x30] sm:$0xff]
    %v411 = vld [vmem:[%s403 + $0x38] sm:$0xff]
    %v412 = vld [vmem:[%s403 + $0x40] sm:$0xff]
    %v413 = vld [vmem:[%s403 + $0x48] sm:$0xff]
    %v414 = vld [vmem:[%s403 + $0x50] sm:$0xff]
    %v415 = vld [vmem:[%s403 + $0x58] sm:$0xff]
    %v416 = vld [vmem:[%s403 + $0x60] sm:$0xff]
    %v417 = vld [vmem:[%s403 + $0x68] sm:$0xff]
    %v418 = vld [vmem:[%s403 + $0x70] sm:$0xff]
    %v419 = vld [vmem:[%s403 + $0x78] sm:$0xff]
    %420 = vmatprep.subr.mxu0 0.0
    %421 = vmatpush1.msra.mxu0 %v419
    %422 = vmatprep.subr.mxu0 0.0
    %423 = vmatpush1.msra.mxu0 %v418
    %424 = vmatprep.subr.mxu0 0.0
    %425 = vmatpush1.msra.mxu0 %v417
    %426 = vmatprep.subr.mxu0 0.0
    %427 = vmatpush1.msra.mxu0 %v416
    %428 = vmatprep.subr.mxu0 0.0
    %429 = vmatpush1.msra.mxu0 %v415
    %430 = vmatprep.subr.mxu0 0.0
    %431 = vmatpush1.msra.mxu0 %v414
    %432 = vmatprep.subr.mxu0 0.0
    %433 = vmatpush1.msra.mxu0 %v413
    %434 = vmatprep.subr.mxu0 0.0
    %435 = vmatpush1.msra.mxu0 %v412
    %436 = vmatprep.subr.mxu0 0.0
    %437 = vmatpush1.msra.mxu0 %v411
    %438 = vmatprep.subr.mxu0 0.0
    %439 = vmatpush1.msra.mxu0 %v410
    %440 = vmatprep.subr.mxu0 0.0
    %441 = vmatpush1.msra.mxu0 %v409
    %442 = vmatprep.subr.mxu0 0.0
    %443 = vmatpush1.msra.mxu0 %v408
    %444 = vmatprep.subr.mxu0 0.0
    %445 = vmatpush1.msra.mxu0 %v407
    %446 = vmatprep.subr.mxu0 0.0
    %447 = vmatpush1.msra.mxu0 %v406
    %448 = vmatprep.subr.mxu0 0.0
    %449 = vmatpush1.msra.mxu0 %v405
    %450 = vmatprep.subr.mxu0 0.0
    %451 = vmatpush1.msra.mxu0 %v404
    %452 = vmatprep.subr.mxu0 0.0
    %453 = vmatpush2.msra.mxu0 0.0
    %454 = vmatprep.subr.mxu0 0.0
    %455 = vmatpush2.msra.mxu0 0.0
    %456 = vmatprep.subr.mxu0 0.0
    %457 = vmatpush2.msra.mxu0 0.0
    %458 = vmatprep.subr.mxu0 0.0
    %459 = vmatpush2.msra.mxu0 0.0
    %460 = vmatprep.subr.mxu0 0.0
    %461 = vmatpush2.msra.mxu0 0.0
    %462 = vmatprep.subr.mxu0 0.0
    %463 = vmatpush2.msra.mxu0 0.0
    %464 = vmatprep.subr.mxu0 0.0
    %465 = vmatpush2.msra.mxu0 0.0
    %466 = vmatprep.subr.mxu0 0.0
    %467 = vmatpush2.msra.mxu0 0.0
    %468 = vmatprep.subr.mxu0 0.0
    %469 = vmatpush2.msra.mxu0 0.0
    %470 = vmatprep.subr.mxu0 0.0
    %471 = vmatpush2.msra.mxu0 0.0
    %472 = vmatprep.subr.mxu0 0.0
    %473 = vmatpush2.msra.mxu0 0.0
    %474 = vmatprep.subr.mxu0 0.0
    %475 = vmatpush2.msra.mxu0 0.0
    %476 = vmatprep.subr.mxu0 0.0
    %477 = vmatpush2.msra.mxu0 0.0
    %478 = vmatprep.subr.mxu0 0.0
    %479 = vmatpush2.msra.mxu0 0.0
    %480 = vmatprep.subr.mxu0 0.0
    %481 = vmatpush2.msra.mxu0 0.0
    %482 = vmatprep.subr.mxu0 0.0
    %483 = vmatpush2.msra.mxu0 0.0
    %484 = vmatprep.mubr.f32.mxu0 0.0
    %485 = vmatmul.mubr.f32.gmra.mxu0 %v402
    %v486 = vpop.f32.mrf.mxu0
    %v487 = vadd.f32 0.0, %v486
    %v488 = vpop.f32.mrf.mxu0
    %489 = vdwg.mxu0
    %v490 = vrot.slane %v487, 4
    %v491 = vadd.f32 %v487, %v490
    %v492 = vrot.slane %v491, 2
    %v493 = vadd.f32 %v491, %v492
    %v494 = vrot.slane %v493, 1
    %v495 = vadd.f32 %v493, %v494
    %v496 = vmul.f32 %v495, %v123
    %v497 = vmul.f32 %v487, %v487
    %v498 = vrot.slane %v497, 4
    %v499 = vadd.f32 %v497, %v498
    %v500 = vrot.slane %v499, 2
    %v501 = vadd.f32 %v499, %v500
    %v502 = vrot.slane %v501, 1
    %v503 = vadd.f32 %v501, %v502
    %v504 = vmul.f32 %v503, %v123
    %v505 = vmul.f32 %v496, %v496
    %v506 = vsub.f32 %v504, %v505
    %v507 = vmax.f32 %v506, 0.0
    %v508 = vadd.f32 %v507, 1e-05
    %v509 = vrsqrt.pop %v508
    %v510 = vmul.f32 %v28, %v509
    %v511 = vmul.f32 %v496, %v510
    %v513 = vrot.slane %v511, 4
    %v515 = vsub.f32 %v28, %v513
    %v516 = vlaneseq
    %v517 = vshrl.u32 %v516, 7
    %v518 = vsub.s32 3, %v517
    %v519 = vrot.slane %v510, %v518
    %v520 = vmul.f32 %v487, %v519
    %v521 = vlaneseq
    %v522 = vshrl.u32 %v521, 7
    %v523 = vsub.s32 7, %v522
    %v524 = vrot.slane %v515, %v523
    %v525 = vadd.f32 %v520, %v524
    %v526 = vmax.f32 %v525, 0.0
    %s527 = scalar_lea.vmem [#allocation2], 512
    %v528 = vld [vmem:[%s527] sm:$0xff]
    %v529 = vld [vmem:[%s527 + $0x8] sm:$0xff]
    %v530 = vld [vmem:[%s527 + $0x10] sm:$0xff]
    %v531 = vld [vmem:[%s527 + $0x18] sm:$0xff]
    %v532 = vld [vmem:[%s527 + $0x20] sm:$0xff]
    %v533 = vld [vmem:[%s527 + $0x28] sm:$0xff]
    %v534 = vld [vmem:[%s527 + $0x30] sm:$0xff]
    %v535 = vld [vmem:[%s527 + $0x38] sm:$0xff]
    %v536 = vld [vmem:[%s527 + $0x40] sm:$0xff]
    %v537 = vld [vmem:[%s527 + $0x48] sm:$0xff]
    %v538 = vld [vmem:[%s527 + $0x50] sm:$0xff]
    %v539 = vld [vmem:[%s527 + $0x58] sm:$0xff]
    %v540 = vld [vmem:[%s527 + $0x60] sm:$0xff]
    %v541 = vld [vmem:[%s527 + $0x68] sm:$0xff]
    %v542 = vld [vmem:[%s527 + $0x70] sm:$0xff]
    %v543 = vld [vmem:[%s527 + $0x78] sm:$0xff]
    %v544 = vlaneseq
    %v545 = vshrl.u32 %v544, 7
    %v546 = vsub.s32 0, %v545
    %v547 = vrot.slane %v29, %v546
    %548 = vmatprep.subr.mxu0 0.0
    %549 = vmatpush1.msra.mxu0 %v543
    %550 = vmatprep.subr.mxu0 0.0
    %551 = vmatpush1.msra.mxu0 %v542
    %552 = vmatprep.subr.mxu0 0.0
    %553 = vmatpush1.msra.mxu0 %v541
    %554 = vmatprep.subr.mxu0 0.0
    %555 = vmatpush1.msra.mxu0 %v540
    %556 = vmatprep.subr.mxu0 0.0
    %557 = vmatpush1.msra.mxu0 %v539
    %558 = vmatprep.subr.mxu0 0.0
    %559 = vmatpush1.msra.mxu0 %v538
    %560 = vmatprep.subr.mxu0 0.0
    %561 = vmatpush1.msra.mxu0 %v537
    %562 = vmatprep.subr.mxu0 0.0
    %563 = vmatpush1.msra.mxu0 %v536
    %564 = vmatprep.subr.mxu0 0.0
    %565 = vmatpush1.msra.mxu0 %v535
    %566 = vmatprep.subr.mxu0 0.0
    %567 = vmatpush1.msra.mxu0 %v534
    %568 = vmatprep.subr.mxu0 0.0
    %569 = vmatpush1.msra.mxu0 %v533
    %570 = vmatprep.subr.mxu0 0.0
    %571 = vmatpush1.msra.mxu0 %v532
    %572 = vmatprep.subr.mxu0 0.0
    %573 = vmatpush1.msra.mxu0 %v531
    %574 = vmatprep.subr.mxu0 0.0
    %575 = vmatpush1.msra.mxu0 %v530
    %576 = vmatprep.subr.mxu0 0.0
    %577 = vmatpush1.msra.mxu0 %v529
    %578 = vmatprep.subr.mxu0 0.0
    %579 = vmatpush1.msra.mxu0 %v528
    %580 = vmatprep.subr.mxu0 0.0
    %581 = vmatpush2.msra.mxu0 0.0
    %582 = vmatprep.subr.mxu0 0.0
    %583 = vmatpush2.msra.mxu0 0.0
    %584 = vmatprep.subr.mxu0 0.0
    %585 = vmatpush2.msra.mxu0 0.0
    %586 = vmatprep.subr.mxu0 0.0
    %587 = vmatpush2.msra.mxu0 0.0
    %588 = vmatprep.subr.mxu0 0.0
    %589 = vmatpush2.msra.mxu0 0.0
    %590 = vmatprep.subr.mxu0 0.0
    %591 = vmatpush2.msra.mxu0 0.0
    %592 = vmatprep.subr.mxu0 0.0
    %593 = vmatpush2.msra.mxu0 0.0
    %594 = vmatprep.subr.mxu0 0.0
    %595 = vmatpush2.msra.mxu0 0.0
    %596 = vmatprep.subr.mxu0 0.0
    %597 = vmatpush2.msra.mxu0 0.0
    %598 = vmatprep.subr.mxu0 0.0
    %599 = vmatpush2.msra.mxu0 0.0
    %600 = vmatprep.subr.mxu0 0.0
    %601 = vmatpush2.msra.mxu0 0.0
    %602 = vmatprep.subr.mxu0 0.0
    %603 = vmatpush2.msra.mxu0 0.0
    %604 = vmatprep.subr.mxu0 0.0
    %605 = vmatpush2.msra.mxu0 0.0
    %606 = vmatprep.subr.mxu0 0.0
    %607 = vmatpush2.msra.mxu0 0.0
    %608 = vmatprep.subr.mxu0 0.0
    %609 = vmatpush2.msra.mxu0 0.0
    %610 = vmatprep.subr.mxu0 0.0
    %611 = vmatpush2.msra.mxu0 0.0
    %612 = vmatprep.mubr.f32.mxu0 0.0
    %613 = vmatmul.mubr.f32.gmra.mxu0 %v526
    %v614 = vpop.f32.mrf.mxu0
    %v615 = vadd.f32 %v547, %v614
    %v616 = vpop.f32.mrf.mxu0
    %617 = vdwg.mxu0
    %618 = vst [vmem:[%s3] sm:$0xff] %v615
    // Predicated region
    $region18: #{mynet_forward.1} parent=1 // pred_check
      _
    $region19: #{mynet_forward.1} parent=1 // pred_check_branch
      %620 = sbr.rel (0) target = $region21
    $region20: #{mynet_forward.1} parent=1 // pred_region
      _
    $region21: #{mynet_forward.1} parent=1 // pred_fallthru
      _
    // Predicated region
    $region22: #{mynet_forward.1} parent=1 // pred_check
      _
    $region23: #{mynet_forward.1} parent=1 // pred_check_branch
      %622 = sbr.rel (0) target = $region25
    $region24: #{mynet_forward.1} parent=1 // pred_region
      _
    $region25: #{mynet_forward.1} parent=1 // pred_fallthru
      _
    %623 = vsyncpa [#allocation3], 1

</llo_original>
